<compile_context>
chip_gen: v7x
topology: tpu7x:2x2x1
jax: 0.10.0
libtpu: 0.0.40
codegen_flags: <defaults>
</compile_context>

<pallas_src>
import jax
import jax.numpy as jnp
from jax.experimental import pallas as pl
from jax.experimental.pallas import tpu as pltpu


_N_CORES = 2          # parallel split of the reduction stream (v7x megacore)
_TILE_BUDGET = 8 << 20   # combined (preds+labels) VMEM bytes per grid step
_MAX_TS = 4096
_TS_ALIGN = 16        # covers bf16 sublane packing (and f32's 8)


def _dice_sums_kernel(p_ref, l_ref, inter_ref, psum_ref, lsum_ref):
    """Accumulate per-batch partial sums over the tiled reduction axis.

    p_ref, l_ref:                   (B, TS, 128) input tiles
    inter_ref, psum_ref, lsum_ref:  (B, 8, 128)  resident accumulators
    """
    k = pl.program_id(1)          # reduction step within this core's stream

    @pl.when(k == 0)
    def _():
        inter_ref[...] = jnp.zeros_like(inter_ref)
        psum_ref[...] = jnp.zeros_like(psum_ref)
        lsum_ref[...] = jnp.zeros_like(lsum_ref)

    # Upcast to f32 for accumulation; sigmoid runs on the EUP.
    p = jax.nn.sigmoid(p_ref[...].astype(jnp.float32))      # (B, TS, 128)
    l = l_ref[...].astype(jnp.float32)

    b, ts, lanes = p.shape
    g = ts // 8
    # Regroup sublane tiles: (B, TS, 128) -> (B, G, 8, 128).  Summing over
    # axis=1 is then pure vreg-aligned VALU adds (no XLU cross-sublane work).
    p4 = p.reshape(b, g, 8, lanes)
    l4 = l.reshape(b, g, 8, lanes)

    inter_ref[...] += jnp.sum(p4 * l4, axis=1)               # (B, 8, 128)
    psum_ref[...] += jnp.sum(p4, axis=1)
    lsum_ref[...] += jnp.sum(l4, axis=1)


def _choose_ts(batch, nr, itemsize_sum):
    """Byte-budgeted, divisibility-robust tile-row selection.

    Targets ~_TILE_BUDGET bytes of combined input tile per grid step, aligned
    to 16 rows (bf16 sublane packing), capped so each core gets at least one
    tile without excessive padding, and capped so double-buffered tiles stay
    well under the v7x 64 MiB VMEM.
    """
    ts = _TILE_BUDGET // max(1, batch * 128 * itemsize_sum)
    ts = (int(ts) // _TS_ALIGN) * _TS_ALIGN
    per_core = pl.cdiv(pl.cdiv(nr, _N_CORES), _TS_ALIGN) * _TS_ALIGN
    ts = max(_TS_ALIGN, min(ts, _MAX_TS, per_core))
    return ts


@jax.jit
def dice_loss(preds, labels):
    """Pallas implementation of DiceLoss.forward.

    preds:  (B, 1, D, H, W) float (f32 or bf16)
    labels: (B, D, H, W)    float (bf16 recommended: 0/1 is exact, halves HBM)
    returns scalar float32
    """
    B = preds.shape[0]
    p_flat = preds.reshape(B, -1)
    l_flat = labels.reshape(B, -1)
    N = p_flat.shape[1]
    assert l_flat.shape[1] == N, "preds/labels spatial volumes must match"

    itemsize_sum = (jnp.dtype(preds.dtype).itemsize
                    + jnp.dtype(labels.dtype).itemsize)

    NR = pl.cdiv(N, 128)
    TS = _choose_ts(B, NR, itemsize_sum)
    steps = pl.cdiv(NR, _N_CORES * TS)
    NR_pad = steps * _N_CORES * TS
    N_pad = NR_pad * 128

    if N_pad != N:
        # preds padded with a large negative -> sigmoid == 0; labels with 0.
        # Padding therefore contributes nothing to intersection or union.
        p_flat = jnp.pad(p_flat, ((0, 0), (0, N_pad - N)),
                         constant_values=-1e9)
        l_flat = jnp.pad(l_flat, ((0, 0), (0, N_pad - N)),
                         constant_values=0.0)

    p3 = p_flat.reshape(B, NR_pad, 128)
    l3 = l_flat.reshape(B, NR_pad, 128)

    in_spec = pl.BlockSpec((B, TS, 128), lambda c, k: (0, c * steps + k, 0))
    acc_spec = pl.BlockSpec((None, B, 8, 128), lambda c, k: (c, 0, 0, 0))
    acc_shape = jax.ShapeDtypeStruct((_N_CORES, B, 8, 128), jnp.float32)

    # Explicit scoped-VMEM limit: double-buffered input tiles + accumulators,
    # kept under v7x's 64 MiB physical VMEM (v5e/v6e have 128 MiB).
    tile_bytes = B * TS * 128 * itemsize_sum
    acc_bytes = 3 * 2 * B * 8 * 128 * 4
    vmem_limit = int(min(max(2 * tile_bytes + acc_bytes + (4 << 20), 32 << 20),
                         64 << 20))

    inter, psum, lsum = pl.pallas_call(
        _dice_sums_kernel,
        out_shape=(acc_shape, acc_shape, acc_shape),
        grid_spec=pltpu.PrefetchScalarGridSpec(
            num_scalar_prefetch=0,
            grid=(_N_CORES, steps),
            in_specs=[in_spec, in_spec],
            out_specs=[acc_spec, acc_spec, acc_spec],
        ),
        compiler_params=pltpu.CompilerParams(
            dimension_semantics=("parallel", "arbitrary"),
            vmem_limit_bytes=vmem_limit),
    )(p3, l3)

    # Cheap glue: collapse core, sublane and lane axes, then the Dice formula.
    intersection = inter.sum(axis=(0, 2, 3))                     # (B,)
    union = psum.sum(axis=(0, 2, 3)) + lsum.sum(axis=(0, 2, 3))  # (B,)
    dice_coeff = (2.0 * intersection + 1e-6) / (union + 1e-6)
    return jnp.mean(1.0 - dice_coeff)


def _dice_loss_ref(preds, labels):
    """Pure-JAX reference matching the PyTorch module."""
    p = jax.nn.sigmoid(preds.astype(jnp.float32))
    p = jnp.squeeze(p, axis=1)
    l = labels.astype(jnp.float32)
    inter = jnp.sum(p * l, axis=(1, 2, 3))
    union = jnp.sum(p, axis=(1, 2, 3)) + jnp.sum(l, axis=(1, 2, 3))
    dice = (2.0 * inter + 1e-6) / (union + 1e-6)
    return jnp.mean(1.0 - dice)


if __name__ == "__main__":
    # Small shapes consistent with (B, 1, D, H, W) / (B, D, H, W).
    B, D, H, W = 2, 8, 16, 16
    key = jax.random.PRNGKey(0)
    kp, kl = jax.random.split(key)
    preds = jax.random.normal(kp, (B, 1, D, H, W), dtype=jnp.float32)
    # Labels stored in bf16 (exact for 0/1) -> 2 B/elem of HBM traffic.
    labels = (jax.random.uniform(kl, (B, D, H, W)) > 0.5).astype(jnp.bfloat16)

    out = dice_loss(preds, labels)
    out = jax.block_until_ready(out)

    ref = jax.block_until_ready(_dice_loss_ref(preds, labels))
    assert jnp.allclose(out, ref, atol=1e-5, rtol=1e-5), (out, ref)

    print("KERNEL_OK")
</pallas_src>

<mosaic_0001>
module attributes {stable_mosaic.version = 11 : i64} {
  func.func @_dice_sums_kernel(%arg0: i32, %arg1: i32, %arg2: memref<2x16x128xf32, #tpu.memory_space<vmem>>, %arg3: memref<2x16x128xbf16, #tpu.memory_space<vmem>>, %arg4: memref<1x2x8x128xf32, #tpu.memory_space<vmem>>, %arg5: memref<1x2x8x128xf32, #tpu.memory_space<vmem>>, %arg6: memref<1x2x8x128xf32, #tpu.memory_space<vmem>>) attributes {dimension_semantics = [#tpu.dimension_semantics<parallel>, #tpu.dimension_semantics<arbitrary>], iteration_bounds = array<i64: 2, 1>, scalar_prefetch = 0 : i64, scratch_operands = 0 : i64, tpu.core_type = #tpu.core_type<tc>, window_params = [{transform_indices = @transform_0, window_bounds = array<i64: 2, 16, 128>}, {transform_indices = @transform_1, window_bounds = array<i64: 2, 16, 128>}, {transform_indices = @transform_2, window_bounds = array<i64: 1, 2, 8, 128>}, {transform_indices = @transform_3, window_bounds = array<i64: 1, 2, 8, 128>}, {transform_indices = @transform_4, window_bounds = array<i64: 1, 2, 8, 128>}]} {
    %c0_i32 = arith.constant 0 : i32
    %0 = arith.cmpi eq, %arg1, %c0_i32 : i32
    %1 = arith.extui %0 : i1 to i32
    %c0_i32_0 = arith.constant 0 : i32
    %2 = arith.cmpi ne, %1, %c0_i32_0 : i32
    scf.if %2 {
      %cst_33 = arith.constant 0.000000e+00 : f32
      %35 = vector.broadcast %cst_33 : f32 to vector<2x8x128xf32>
      %c0_34 = arith.constant 0 : index
      %c0_35 = arith.constant 0 : index
      %c0_36 = arith.constant 0 : index
      %c0_37 = arith.constant 0 : index
      %36 = vector.load %arg4[%c0_34, %c0_35, %c0_36, %c0_37] : memref<1x2x8x128xf32, #tpu.memory_space<vmem>>, vector<1x2x8x128xf32>
      %37 = vector.shape_cast %36 : vector<1x2x8x128xf32> to vector<2x8x128xf32>
      %38 = vector.shape_cast %35 : vector<2x8x128xf32> to vector<1x2x8x128xf32>
      tpu.vector_store %arg4[%c0_34, %c0_35, %c0_36, %c0_37], %38 {strides = array<i32>} : memref<1x2x8x128xf32, #tpu.memory_space<vmem>>, vector<1x2x8x128xf32>,
      %cst_38 = arith.constant 0.000000e+00 : f32
      %39 = vector.broadcast %cst_38 : f32 to vector<2x8x128xf32>
      %c0_39 = arith.constant 0 : index
      %c0_40 = arith.constant 0 : index
      %c0_41 = arith.constant 0 : index
      %c0_42 = arith.constant 0 : index
      %40 = vector.load %arg5[%c0_39, %c0_40, %c0_41, %c0_42] : memref<1x2x8x128xf32, #tpu.memory_space<vmem>>, vector<1x2x8x128xf32>
      %41 = vector.shape_cast %40 : vector<1x2x8x128xf32> to vector<2x8x128xf32>
      %42 = vector.shape_cast %39 : vector<2x8x128xf32> to vector<1x2x8x128xf32>
      tpu.vector_store %arg5[%c0_39, %c0_40, %c0_41, %c0_42], %42 {strides = array<i32>} : memref<1x2x8x128xf32, #tpu.memory_space<vmem>>, vector<1x2x8x128xf32>,
      %cst_43 = arith.constant 0.000000e+00 : f32
      %43 = vector.broadcast %cst_43 : f32 to vector<2x8x128xf32>
      %c0_44 = arith.constant 0 : index
      %c0_45 = arith.constant 0 : index
      %c0_46 = arith.constant 0 : index
      %c0_47 = arith.constant 0 : index
      %44 = vector.load %arg6[%c0_44, %c0_45, %c0_46, %c0_47] : memref<1x2x8x128xf32, #tpu.memory_space<vmem>>, vector<1x2x8x128xf32>
      %45 = vector.shape_cast %44 : vector<1x2x8x128xf32> to vector<2x8x128xf32>
      %46 = vector.shape_cast %43 : vector<2x8x128xf32> to vector<1x2x8x128xf32>
      tpu.vector_store %arg6[%c0_44, %c0_45, %c0_46, %c0_47], %46 {strides = array<i32>} : memref<1x2x8x128xf32, #tpu.memory_space<vmem>>, vector<1x2x8x128xf32>,
    } else {
    }
    %c0 = arith.constant 0 : index
    %c0_1 = arith.constant 0 : index
    %c0_2 = arith.constant 0 : index
    %3 = vector.load %arg2[%c0, %c0_1, %c0_2] : memref<2x16x128xf32, #tpu.memory_space<vmem>>, vector<2x16x128xf32>
    %4 = arith.negf %3 : vector<2x16x128xf32>
    %5 = math.exp %4 : vector<2x16x128xf32>
    %cst = arith.constant 1.000000e+00 : f32
    %6 = vector.broadcast %cst : f32 to vector<2x16x128xf32>
    %7 = arith.addf %6, %5 : vector<2x16x128xf32>
    %8 = arith.divf %6, %7 : vector<2x16x128xf32>
    %c0_3 = arith.constant 0 : index
    %c0_4 = arith.constant 0 : index
    %c0_5 = arith.constant 0 : index
    %9 = vector.load %arg3[%c0_3, %c0_4, %c0_5] : memref<2x16x128xbf16, #tpu.memory_space<vmem>>, vector<2x16x128xbf16>
    %10 = arith.extf %9 : vector<2x16x128xbf16> to vector<2x16x128xf32>
    %11 = vector.shape_cast %8 : vector<2x16x128xf32> to vector<2x2x8x128xf32>
    %12 = vector.shape_cast %10 : vector<2x16x128xf32> to vector<2x2x8x128xf32>
    %c0_6 = arith.constant 0 : index
    %c0_7 = arith.constant 0 : index
    %c0_8 = arith.constant 0 : index
    %c0_9 = arith.constant 0 : index
    %13 = vector.load %arg4[%c0_6, %c0_7, %c0_8, %c0_9] : memref<1x2x8x128xf32, #tpu.memory_space<vmem>>, vector<1x2x8x128xf32>
    %14 = vector.shape_cast %13 : vector<1x2x8x128xf32> to vector<2x8x128xf32>
    %15 = arith.mulf %11, %12 : vector<2x2x8x128xf32>
    %cst_10 = arith.constant dense<0.000000e+00> : vector<2x8x128xf32>
    %16 = vector.multi_reduction <add>, %15, %cst_10 [1] : vector<2x2x8x128xf32> to vector<2x8x128xf32>
    %17 = arith.addf %14, %16 : vector<2x8x128xf32>
    %c0_11 = arith.constant 0 : index
    %c0_12 = arith.constant 0 : index
    %c0_13 = arith.constant 0 : index
    %c0_14 = arith.constant 0 : index
    %18 = vector.load %arg4[%c0_11, %c0_12, %c0_13, %c0_14] : memref<1x2x8x128xf32, #tpu.memory_space<vmem>>, vector<1x2x8x128xf32>
    %19 = vector.shape_cast %18 : vector<1x2x8x128xf32> to vector<2x8x128xf32>
    %20 = vector.shape_cast %17 : vector<2x8x128xf32> to vector<1x2x8x128xf32>
    tpu.vector_store %arg4[%c0_11, %c0_12, %c0_13, %c0_14], %20 {strides = array<i32>} : memref<1x2x8x128xf32, #tpu.memory_space<vmem>>, vector<1x2x8x128xf32>,
    %c0_15 = arith.constant 0 : index
    %c0_16 = arith.constant 0 : index
    %c0_17 = arith.constant 0 : index
    %c0_18 = arith.constant 0 : index
    %21 = vector.load %arg5[%c0_15, %c0_16, %c0_17, %c0_18] : memref<1x2x8x128xf32, #tpu.memory_space<vmem>>, vector<1x2x8x128xf32>
    %22 = vector.shape_cast %21 : vector<1x2x8x128xf32> to vector<2x8x128xf32>
    %cst_19 = arith.constant dense<0.000000e+00> : vector<2x8x128xf32>
    %23 = vector.multi_reduction <add>, %11, %cst_19 [1] : vector<2x2x8x128xf32> to vector<2x8x128xf32>
    %24 = arith.addf %22, %23 : vector<2x8x128xf32>
    %c0_20 = arith.constant 0 : index
    %c0_21 = arith.constant 0 : index
    %c0_22 = arith.constant 0 : index
    %c0_23 = arith.constant 0 : index
    %25 = vector.load %arg5[%c0_20, %c0_21, %c0_22, %c0_23] : memref<1x2x8x128xf32, #tpu.memory_space<vmem>>, vector<1x2x8x128xf32>
    %26 = vector.shape_cast %25 : vector<1x2x8x128xf32> to vector<2x8x128xf32>
    %27 = vector.shape_cast %24 : vector<2x8x128xf32> to vector<1x2x8x128xf32>
    tpu.vector_store %arg5[%c0_20, %c0_21, %c0_22, %c0_23], %27 {strides = array<i32>} : memref<1x2x8x128xf32, #tpu.memory_space<vmem>>, vector<1x2x8x128xf32>,
    %c0_24 = arith.constant 0 : index
    %c0_25 = arith.constant 0 : index
    %c0_26 = arith.constant 0 : index
    %c0_27 = arith.constant 0 : index
    %28 = vector.load %arg6[%c0_24, %c0_25, %c0_26, %c0_27] : memref<1x2x8x128xf32, #tpu.memory_space<vmem>>, vector<1x2x8x128xf32>
    %29 = vector.shape_cast %28 : vector<1x2x8x128xf32> to vector<2x8x128xf32>
    %cst_28 = arith.constant dense<0.000000e+00> : vector<2x8x128xf32>
    %30 = vector.multi_reduction <add>, %12, %cst_28 [1] : vector<2x2x8x128xf32> to vector<2x8x128xf32>
    %31 = arith.addf %29, %30 : vector<2x8x128xf32>
    %c0_29 = arith.constant 0 : index
    %c0_30 = arith.constant 0 : index
    %c0_31 = arith.constant 0 : index
    %c0_32 = arith.constant 0 : index
    %32 = vector.load %arg6[%c0_29, %c0_30, %c0_31, %c0_32] : memref<1x2x8x128xf32, #tpu.memory_space<vmem>>, vector<1x2x8x128xf32>
    %33 = vector.shape_cast %32 : vector<1x2x8x128xf32> to vector<2x8x128xf32>
    %34 = vector.shape_cast %31 : vector<2x8x128xf32> to vector<1x2x8x128xf32>
    tpu.vector_store %arg6[%c0_29, %c0_30, %c0_31, %c0_32], %34 {strides = array<i32>} : memref<1x2x8x128xf32, #tpu.memory_space<vmem>>, vector<1x2x8x128xf32>,
    return
  }
  func.func @transform_0(%arg0: i32, %arg1: i32) -> (i32, i32, i32) {
    %c1_i32 = arith.constant 1 : i32
    %0 = arith.muli %arg0, %c1_i32 : i32
    %1 = arith.addi %0, %arg1 : i32
    %c0_i32 = arith.constant 0 : i32
    %c0_i32_0 = arith.constant 0 : i32
    %c0_i32_1 = arith.constant 0 : i32
    return %c0_i32, %1, %c0_i32_0 : i32, i32, i32
  }
  func.func @transform_1(%arg0: i32, %arg1: i32) -> (i32, i32, i32) {
    %c1_i32 = arith.constant 1 : i32
    %0 = arith.muli %arg0, %c1_i32 : i32
    %1 = arith.addi %0, %arg1 : i32
    %c0_i32 = arith.constant 0 : i32
    %c0_i32_0 = arith.constant 0 : i32
    %c0_i32_1 = arith.constant 0 : i32
    return %c0_i32, %1, %c0_i32_0 : i32, i32, i32
  }
  func.func @transform_2(%arg0: i32, %arg1: i32) -> (i32, i32, i32, i32) {
    %c0_i32 = arith.constant 0 : i32
    %c0_i32_0 = arith.constant 0 : i32
    %c0_i32_1 = arith.constant 0 : i32
    %c0_i32_2 = arith.constant 0 : i32
    return %arg0, %c0_i32, %c0_i32_0, %c0_i32_1 : i32, i32, i32, i32
  }
  func.func @transform_3(%arg0: i32, %arg1: i32) -> (i32, i32, i32, i32) {
    %c0_i32 = arith.constant 0 : i32
    %c0_i32_0 = arith.constant 0 : i32
    %c0_i32_1 = arith.constant 0 : i32
    %c0_i32_2 = arith.constant 0 : i32
    return %arg0, %c0_i32, %c0_i32_0, %c0_i32_1 : i32, i32, i32, i32
  }
  func.func @transform_4(%arg0: i32, %arg1: i32) -> (i32, i32, i32, i32) {
    %c0_i32 = arith.constant 0 : i32
    %c0_i32_0 = arith.constant 0 : i32
    %c0_i32_1 = arith.constant 0 : i32
    %c0_i32_2 = arith.constant 0 : i32
    return %arg0, %c0_i32, %c0_i32_0, %c0_i32_1 : i32, i32, i32, i32
  }
}

</mosaic_0001>

<llo_original>
// kernel: dice_loss.1
$region0: #{dice_loss.1}
  #allocation0 [shape = 'u32[]', space=smem, size = 0x4, offset = 0x4, fixed_abs, tag = 'smem constant byte address 0x4 - core index']
  #allocation1 [shape = 'u32[144,128]{1,0:T(1,128)}', space=vmem, size = 0x12000, scoped, tag = 'internal scratch']
  %s0 = inlined_call_operand.vmem [shape: f32[2,32,128], index: 0, kind: input, shape index: {}]
  %s1 = inlined_call_operand.vmem [shape: bf16[2,32,128], index: 1, kind: input, shape index: {}]
  %s2 = inlined_call_operand.vmem [shape: f32[2,2,8,128], index: 2, kind: output, shape index: {0}]
  %s3 = inlined_call_operand.vmem [shape: f32[2,2,8,128], index: 3, kind: output, shape index: {1}]
  %s4 = inlined_call_operand.vmem [shape: f32[2,2,8,128], index: 4, kind: output, shape index: {2}]
  %5 = xla_tuple %s2, %s3, %s4
  %s6 = sld [smem:[#allocation0]]
  $region140: #{dice_loss.1} parent=0
    _
  %s8 = ssub.s32 1, %s6
  %s9 = scalar_select 0, %s8, %s6
  $region1: #{dice_loss.1} parent=0
    #allocation2 [shape = 'u8[32768]{0}', space=vmem, size = 0x8000, scoped, tag = 'input window, operand 0']
    #allocation3 [shape = 'u8[16384]{0}', space=vmem, size = 0x4000, scoped, tag = 'input window, operand 1']
    loop: start=0, step=1, limit=4
    $region2: #{dice_loss.1} parent=1 // loop_pre_header
      _
    $region3: #{dice_loss.1} parent=1 // loop_header
      %s11 = sphi 0, %s15
      %p12 = scmp.ge.s32.totalorder %s11, 4
      %s18 = sphi 0, %s30
      %s19 = sphi 0, %s26
      %s20 = sphi 0, %s18
      %s21 = sphi 0, %s19
      %s22 = sphi 0, %s20
      %s23 = sphi 0, %s21
      %s35 = sphi 0, %s37
      %s38 = sphi 0, %s35
      %s39 = sphi 0, %s38
      %s55 = sphi 0, %s39
      %s63 = sphi 0, %s65
      %s66 = sphi 0, %s63
      %s67 = sphi 0, %s66
      %s83 = sphi 0, %s67
      %s89 = sphi 0, %s91
      %s92 = sphi 0, %s89
      %s93 = sphi 0, %s92
      %s109 = sphi 0, %s93
      %s115 = sphi 0, %s117
      %s118 = sphi 0, %s115
      %s119 = sphi 0, %s118
      %s135 = sphi 0, %s119
      %s141 = sphi 0, %s143
      %s144 = sphi 0, %s141
      %s145 = sphi 0, %s144
      %s161 = sphi 0, %s145
    $region4: #{dice_loss.1} parent=1 // loop_header_branch
      %14 = sbr.rel (%p12) target = $region8
    $region5: #{dice_loss.1} parent=1 // loop_body
      %s16 = ssub.s32 %s11, 1
      %s17 = ssub.s32 %s11, 2
      %s24 = sadd.s32 1, %s19
      %p25 = scmp.ge.s32.totalorder %s24, 1
      %s26 = scalar_select %p25, 0, %s24
      %s27 = sadd.s32 1, %s18
      %s28 = scalar_select %p25, %s27, %s18
      %p29 = scmp.ge.s32.totalorder %s28, 2
      %s30 = scalar_select %p29, 0, %s28
      %s31 = sadd.s32 %s18, %s19
      %s32 = sadd.s32 %s30, %s26
      %s33 = ssub.s32 %s31, %s32
      %p34 = scmp.eq.s32.totalorder %s33, 0
      %s36 = sadd.s32 %s35, 1
      %s37 = scalar_select %p34, %s35, %s36
      %p40 = pneg %p34
      %p41 = scmp.eq.s32.totalorder %s11, 1
      %p42 = por %p40, %p41
      %p43 = scmp.ne.s32.totalorder %s35, %s38
      %p44 = scmp.eq.s32.totalorder %s11, 0
      %p45 = por %p43, %p44
      %p46 = scmp.ne.s32.totalorder %s35, %s38
      %p47 = scmp.eq.s32.totalorder %s16, 1
      %p48 = por %p46, %p47
      %p49 = scmp.ne.s32.totalorder %s38, %s39
      %p50 = scmp.eq.s32.totalorder %s16, 0
      %p51 = por %p49, %p50
      %p52 = scmp.ne.s32.totalorder %s38, %s39
      %p53 = scmp.eq.s32.totalorder %s17, 1
      %p54 = por %p52, %p53
      %p56 = scmp.ne.s32.totalorder %s39, %s55
      %p57 = scmp.eq.s32.totalorder %s17, 0
      %p58 = por %p56, %p57
      %s59 = sadd.s32 %s18, %s19
      %s60 = sadd.s32 %s30, %s26
      %s61 = ssub.s32 %s59, %s60
      %p62 = scmp.eq.s32.totalorder %s61, 0
      %s64 = sadd.s32 %s63, 1
      %s65 = scalar_select %p62, %s63, %s64
      %p68 = pneg %p62
      %p69 = scmp.eq.s32.totalorder %s11, 1
      %p70 = por %p68, %p69
      %p71 = scmp.ne.s32.totalorder %s63, %s66
      %p72 = scmp.eq.s32.totalorder %s11, 0
      %p73 = por %p71, %p72
      %p74 = scmp.ne.s32.totalorder %s63, %s66
      %p75 = scmp.eq.s32.totalorder %s16, 1
      %p76 = por %p74, %p75
      %p77 = scmp.ne.s32.totalorder %s66, %s67
      %p78 = scmp.eq.s32.totalorder %s16, 0
      %p79 = por %p77, %p78
      %p80 = scmp.ne.s32.totalorder %s66, %s67
      %p81 = scmp.eq.s32.totalorder %s17, 1
      %p82 = por %p80, %p81
      %p84 = scmp.ne.s32.totalorder %s67, %s83
      %p85 = scmp.eq.s32.totalorder %s17, 0
      %p86 = por %p84, %p85
      %s87 = ssub.s32 %s18, %s30
      %p88 = scmp.eq.s32.totalorder %s87, 0
      %s90 = sadd.s32 %s89, 1
      %s91 = scalar_select %p88, %s89, %s90
      %p94 = pneg %p88
      %p95 = scmp.eq.s32.totalorder %s11, 1
      %p96 = por %p94, %p95
      %p97 = scmp.ne.s32.totalorder %s89, %s92
      %p98 = scmp.eq.s32.totalorder %s11, 0
      %p99 = por %p97, %p98
      %p100 = scmp.ne.s32.totalorder %s89, %s92
      %p101 = scmp.eq.s32.totalorder %s16, 1
      %p102 = por %p100, %p101
      %p103 = scmp.ne.s32.totalorder %s92, %s93
      %p104 = scmp.eq.s32.totalorder %s16, 0
      %p105 = por %p103, %p104
      %p106 = scmp.ne.s32.totalorder %s92, %s93
      %p107 = scmp.eq.s32.totalorder %s17, 1
      %p108 = por %p106, %p107
      %p110 = scmp.ne.s32.totalorder %s93, %s109
      %p111 = scmp.eq.s32.totalorder %s17, 0
      %p112 = por %p110, %p111
      %s113 = ssub.s32 %s18, %s30
      %p114 = scmp.eq.s32.totalorder %s113, 0
      %s116 = sadd.s32 %s115, 1
      %s117 = scalar_select %p114, %s115, %s116
      %p120 = pneg %p114
      %p121 = scmp.eq.s32.totalorder %s11, 1
      %p122 = por %p120, %p121
      %p123 = scmp.ne.s32.totalorder %s115, %s118
      %p124 = scmp.eq.s32.totalorder %s11, 0
      %p125 = por %p123, %p124
      %p126 = scmp.ne.s32.totalorder %s115, %s118
      %p127 = scmp.eq.s32.totalorder %s16, 1
      %p128 = por %p126, %p127
      %p129 = scmp.ne.s32.totalorder %s118, %s119
      %p130 = scmp.eq.s32.totalorder %s16, 0
      %p131 = por %p129, %p130
      %p132 = scmp.ne.s32.totalorder %s118, %s119
      %p133 = scmp.eq.s32.totalorder %s17, 1
      %p134 = por %p132, %p133
      %p136 = scmp.ne.s32.totalorder %s119, %s135
      %p137 = scmp.eq.s32.totalorder %s17, 0
      %p138 = por %p136, %p137
      %s139 = ssub.s32 %s18, %s30
      %p140 = scmp.eq.s32.totalorder %s139, 0
      %s142 = sadd.s32 %s141, 1
      %s143 = scalar_select %p140, %s141, %s142
      %p146 = pneg %p140
      %p147 = scmp.eq.s32.totalorder %s11, 1
      %p148 = por %p146, %p147
      %p149 = scmp.ne.s32.totalorder %s141, %s144
      %p150 = scmp.eq.s32.totalorder %s11, 0
      %p151 = por %p149, %p150
      %p152 = scmp.ne.s32.totalorder %s141, %s144
      %p153 = scmp.eq.s32.totalorder %s16, 1
      %p154 = por %p152, %p153
      %p155 = scmp.ne.s32.totalorder %s144, %s145
      %p156 = scmp.eq.s32.totalorder %s16, 0
      %p157 = por %p155, %p156
      %p158 = scmp.ne.s32.totalorder %s144, %s145
      %p159 = scmp.eq.s32.totalorder %s17, 1
      %p160 = por %p158, %p159
      %p162 = scmp.ne.s32.totalorder %s145, %s161
      %p163 = scmp.eq.s32.totalorder %s17, 0
      %p164 = por %p162, %p163
      %p165 = scmp.le.s32.totalorder 1, %s11
      %p166 = scmp.lt.s32.totalorder %s11, 3
      %p167 = pnand %p165, %p166
      %p168 = pneg %p167
      // Predicated region
      $region9: #{dice_loss.1} parent=5 // pred_check
        _
      $region10: #{dice_loss.1} parent=5 // pred_check_branch
        %170 = sbr.rel (%p167) target = $region12
      $region11: #{dice_loss.1} parent=5 // pred_region
        %s171 = ssub.s32 %s11, 1
      $region12: #{dice_loss.1} parent=5 // pred_fallthru
        _
      %p172 = scmp.lt.s32.totalorder %s11, 2
      // Predicated region
      $region13: #{dice_loss.1} parent=5 // pred_check
        %p173 = pneg %p172
      $region14: #{dice_loss.1} parent=5 // pred_check_branch
        %175 = sbr.rel (%p173) target = $region16
      $region15: #{dice_loss.1} parent=5 // pred_region
        // Predicated region
        $region17: #{dice_loss.1} parent=15 // pred_check
          %p176 = pneg %p45
        $region18: #{dice_loss.1} parent=15 // pred_check_branch
          %178 = sbr.rel (%p176) target = $region20
        $region19: #{dice_loss.1} parent=15 // pred_region
          %s179 = sand.u32 %s35, 1
          %s180 = sand.u32 %s35, 1
          %s181 = smul.addr %s180, 32
          %s182 = scalar_lea.vmem [#allocation2], %s181
          %s183 = sadd.s32 %s18, %s19
          %s184 = smul.u32 2, %s183
          %s185 = smul.addr %s184, 8
          %s186 = scalar_lea.vmem %s0, %s185
          // Predicated region
          $region21: #{dice_loss.1} parent=19 // pred_check
            _
          $region22: #{dice_loss.1} parent=19 // pred_check_branch
            %188 = sbr.rel (0) target = $region24
          $region23: #{dice_loss.1} parent=19 // pred_region
            // Predicated region
            $region25: #{dice_loss.1} parent=23 // pred_check
              _
            $region26: #{dice_loss.1} parent=23 // pred_check_branch
              %190 = sbr.rel (0) target = $region28
            $region27: #{dice_loss.1} parent=23 // pred_region
              // Predicated region
              $region40: #{dice_loss.1} parent=27 // pred_check
                _
              $region41: #{dice_loss.1} parent=27 // pred_check_branch
                %211 = sbr.rel (0) target = $region43
              $region42: #{dice_loss.1} parent=27 // pred_region
                loop: start=0, step=1, limit=1
                $region44: #{dice_loss.1} parent=42 // loop_pre_header
                  _
                $region45: #{dice_loss.1} parent=42 // loop_header
                  %s213 = sphi 0, %s217
                  %p214 = scmp.ge.s32.totalorder %s213, 1
                  %s218 = sphi %s186, %s186
                  %s219 = sphi %s182, %s182
                $region46: #{dice_loss.1} parent=42 // loop_header_branch
                  %216 = sbr.rel (%p214) target = $region50
                $region47: #{dice_loss.1} parent=42 // loop_body
                  %v220 = vld [vmem:[%s218] sm:$0xff]
                  %221 = vst [vmem:[%s219] sm:$0xff] %v220
                  %v222 = vld [vmem:[%s218 + $0x8] sm:$0xff]
                  %223 = vst [vmem:[%s219 + $0x8] sm:$0xff] %v222
                  %v224 = vld [vmem:[%s218 + $0x20] sm:$0xff]
                  %225 = vst [vmem:[%s219 + $0x10] sm:$0xff] %v224
                  %v226 = vld [vmem:[%s218 + $0x28] sm:$0xff]
                  %227 = vst [vmem:[%s219 + $0x18] sm:$0xff] %v226
                $region48: #{dice_loss.1} parent=42 // loop_footer
                  %s217 = sadd.s32 1, %s213
                $region49: #{dice_loss.1} parent=42 // loop_footer_branch
                  %212 = sbr.rel target = $region45
                $region50: #{dice_loss.1} parent=42 // loop_exit
                  _
              $region43: #{dice_loss.1} parent=27 // pred_fallthru
                _
              // Predicated region
              $region51: #{dice_loss.1} parent=27 // pred_check
                _
              $region52: #{dice_loss.1} parent=27 // pred_check_branch
                %229 = sbr.rel target = $region54
              $region53: #{dice_loss.1} parent=27 // pred_region
                _
              $region54: #{dice_loss.1} parent=27 // pred_fallthru
                _
            $region28: #{dice_loss.1} parent=23 // pred_fallthru
              _
            // Predicated region
            $region29: #{dice_loss.1} parent=23 // pred_check
              _
            $region30: #{dice_loss.1} parent=23 // pred_check_branch
              %192 = sbr.rel target = $region32
            $region31: #{dice_loss.1} parent=23 // pred_region
              loop: start=0, step=1, limit=1
              $region33: #{dice_loss.1} parent=31 // loop_pre_header
                _
              $region34: #{dice_loss.1} parent=31 // loop_header
                %s195 = sphi 0, %s199
                %p196 = scmp.ge.s32.totalorder %s195, 1
                %s200 = sphi %s186, %s186
                %s201 = sphi %s182, %s182
              $region35: #{dice_loss.1} parent=31 // loop_header_branch
                %198 = sbr.rel (%p196) target = $region39
              $region36: #{dice_loss.1} parent=31 // loop_body
                %v202 = vld [vmem:[%s200] sm:$0xff]
                %203 = vst [vmem:[%s201] sm:$0xff] %v202
                %v204 = vld [vmem:[%s200 + $0x8] sm:$0xff]
                %205 = vst [vmem:[%s201 + $0x8] sm:$0xff] %v204
                %v206 = vld [vmem:[%s200 + $0x20] sm:$0xff]
                %207 = vst [vmem:[%s201 + $0x10] sm:$0xff] %v206
                %v208 = vld [vmem:[%s200 + $0x28] sm:$0xff]
                %209 = vst [vmem:[%s201 + $0x18] sm:$0xff] %v208
              $region37: #{dice_loss.1} parent=31 // loop_footer
                %s199 = sadd.s32 1, %s195
              $region38: #{dice_loss.1} parent=31 // loop_footer_branch
                %194 = sbr.rel target = $region34
              $region39: #{dice_loss.1} parent=31 // loop_exit
                _
            $region32: #{dice_loss.1} parent=23 // pred_fallthru
              _
          $region24: #{dice_loss.1} parent=19 // pred_fallthru
            _
          %230 = vnop
        $region20: #{dice_loss.1} parent=15 // pred_fallthru
          _
        // Predicated region
        $region55: #{dice_loss.1} parent=15 // pred_check
          %p231 = pneg %p73
        $region56: #{dice_loss.1} parent=15 // pred_check_branch
          %233 = sbr.rel (%p231) target = $region58
        $region57: #{dice_loss.1} parent=15 // pred_region
          %s234 = sand.u32 %s63, 1
          %s235 = sand.u32 %s63, 1
          %s236 = smul.addr %s235, 16
          %s237 = scalar_lea.vmem [#allocation3], %s236
          %s238 = sadd.s32 %s18, %s19
          %s239 = smul.u32 2, %s238
          %s240 = smul.addr %s239, 4
          %s241 = scalar_lea.vmem %s1, %s240
          // Predicated region
          $region59: #{dice_loss.1} parent=57 // pred_check
            _
          $region60: #{dice_loss.1} parent=57 // pred_check_branch
            %243 = sbr.rel (0) target = $region62
          $region61: #{dice_loss.1} parent=57 // pred_region
            // Predicated region
            $region63: #{dice_loss.1} parent=61 // pred_check
              _
            $region64: #{dice_loss.1} parent=61 // pred_check_branch
              %245 = sbr.rel target = $region66
            $region65: #{dice_loss.1} parent=61 // pred_region
              // Predicated region
              $region78: #{dice_loss.1} parent=65 // pred_check
                _
              $region79: #{dice_loss.1} parent=65 // pred_check_branch
                %266 = sbr.rel (0) target = $region81
              $region80: #{dice_loss.1} parent=65 // pred_region
                loop: start=0, step=1, limit=1
                $region82: #{dice_loss.1} parent=80 // loop_pre_header
                  _
                $region83: #{dice_loss.1} parent=80 // loop_header
                  %s268 = sphi 0, %s272
                  %p269 = scmp.ge.s32.totalorder %s268, 1
                  %s273 = sphi %s241, %s241
                  %s274 = sphi %s237, %s237
                $region84: #{dice_loss.1} parent=80 // loop_header_branch
                  %271 = sbr.rel (%p269) target = $region88
                $region85: #{dice_loss.1} parent=80 // loop_body
                  _
                $region86: #{dice_loss.1} parent=80 // loop_footer
                  %s272 = sadd.s32 1, %s268
                $region87: #{dice_loss.1} parent=80 // loop_footer_branch
                  %267 = sbr.rel target = $region83
                $region88: #{dice_loss.1} parent=80 // loop_exit
                  _
                loop: start=0, step=1, limit=1
                $region89: #{dice_loss.1} parent=80 // loop_pre_header
                  _
                $region90: #{dice_loss.1} parent=80 // loop_header
                  %s277 = sphi 0, %s281
                  %p278 = scmp.ge.s32.totalorder %s277, 1
                  %s282 = sphi %s241, %s241
                  %s283 = sphi %s237, %s237
                $region91: #{dice_loss.1} parent=80 // loop_header_branch
                  %280 = sbr.rel (%p278) target = $region95
                $region92: #{dice_loss.1} parent=80 // loop_body
                  %v284 = vld [vmem:[%s282] sm:$0xf]
                  %285 = vst [vmem:[%s283] sm:$0xf] %v284
                  %v286 = vld [vmem:[%s282 + $0x4] sm:$0xf]
                  %287 = vst [vmem:[%s283 + $0x4] sm:$0xf] %v286
                  %v288 = vld [vmem:[%s282 + $0x10] sm:$0xf]
                  %289 = vst [vmem:[%s283 + $0x8] sm:$0xf] %v288
                  %v290 = vld [vmem:[%s282 + $0x14] sm:$0xf]
                  %291 = vst [vmem:[%s283 + $0xc] sm:$0xf] %v290
                $region93: #{dice_loss.1} parent=80 // loop_footer
                  %s281 = sadd.s32 1, %s277
                $region94: #{dice_loss.1} parent=80 // loop_footer_branch
                  %276 = sbr.rel target = $region90
                $region95: #{dice_loss.1} parent=80 // loop_exit
                  _
              $region81: #{dice_loss.1} parent=65 // pred_fallthru
                _
            $region66: #{dice_loss.1} parent=61 // pred_fallthru
              _
            // Predicated region
            $region67: #{dice_loss.1} parent=61 // pred_check
              _
            $region68: #{dice_loss.1} parent=61 // pred_check_branch
              %247 = sbr.rel (0) target = $region70
            $region69: #{dice_loss.1} parent=61 // pred_region
              loop: start=0, step=1, limit=1
              $region71: #{dice_loss.1} parent=69 // loop_pre_header
                _
              $region72: #{dice_loss.1} parent=69 // loop_header
                %s250 = sphi 0, %s254
                %p251 = scmp.ge.s32.totalorder %s250, 1
                %s255 = sphi %s241, %s241
                %s256 = sphi %s237, %s237
              $region73: #{dice_loss.1} parent=69 // loop_header_branch
                %253 = sbr.rel (%p251) target = $region77
              $region74: #{dice_loss.1} parent=69 // loop_body
                %v257 = vld [vmem:[%s255] sm:$0xf]
                %258 = vst [vmem:[%s256] sm:$0xf] %v257
                %v259 = vld [vmem:[%s255 + $0x4] sm:$0xf]
                %260 = vst [vmem:[%s256 + $0x4] sm:$0xf] %v259
                %v261 = vld [vmem:[%s255 + $0x10] sm:$0xf]
                %262 = vst [vmem:[%s256 + $0x8] sm:$0xf] %v261
                %v263 = vld [vmem:[%s255 + $0x14] sm:$0xf]
                %264 = vst [vmem:[%s256 + $0xc] sm:$0xf] %v263
              $region75: #{dice_loss.1} parent=69 // loop_footer
                %s254 = sadd.s32 1, %s250
              $region76: #{dice_loss.1} parent=69 // loop_footer_branch
                %249 = sbr.rel target = $region72
              $region77: #{dice_loss.1} parent=69 // loop_exit
                _
            $region70: #{dice_loss.1} parent=61 // pred_fallthru
              _
          $region62: #{dice_loss.1} parent=57 // pred_fallthru
            _
          %292 = vnop
        $region58: #{dice_loss.1} parent=15 // pred_fallthru
          _
      $region16: #{dice_loss.1} parent=5 // pred_fallthru
        _
      %p293 = scmp.le.s32.totalorder 1, %s11
      %p294 = scmp.lt.s32.totalorder %s11, 3
      %p295 = pnand %p293, %p294
      %p296 = pneg %p295
      // Predicated region
      $region96: #{dice_loss.1} parent=5 // pred_check
        _
      $region97: #{dice_loss.1} parent=5 // pred_check_branch
        %298 = sbr.rel (%p295) target = $region99
      $region98: #{dice_loss.1} parent=5 // pred_region
        %s299 = ssub.s32 %s11, 1
        %s300 = sand.u32 %s38, 1
        %s301 = sand.u32 %s38, 1
        %s302 = smul.addr %s301, 32
        %s303 = scalar_lea.vmem [#allocation2], %s302
        // Predicated region
        $region100: #{dice_loss.1} parent=98 // pred_check
          %p304 = pneg %p51
        $region101: #{dice_loss.1} parent=98 // pred_check_branch
          %306 = sbr.rel (%p304) target = $region103
        $region102: #{dice_loss.1} parent=98 // pred_region
          _
        $region103: #{dice_loss.1} parent=98 // pred_fallthru
          _
        %s307 = sand.u32 %s66, 1
        %s308 = sand.u32 %s66, 1
        %s309 = smul.addr %s308, 16
        %s310 = scalar_lea.vmem [#allocation3], %s309
        // Predicated region
        $region104: #{dice_loss.1} parent=98 // pred_check
          %p311 = pneg %p79
        $region105: #{dice_loss.1} parent=98 // pred_check_branch
          %313 = sbr.rel (%p311) target = $region107
        $region106: #{dice_loss.1} parent=98 // pred_region
          _
        $region107: #{dice_loss.1} parent=98 // pred_fallthru
          _
        %s314 = sand.u32 %s38, 1
        %s315 = sand.u32 %s38, 1
        %s316 = smul.addr %s315, 32
        %s317 = scalar_lea.vmem [#allocation2], %s316
        %p318 = pneg %p51
        %p319 = pneg %p48
        %s320 = sand.u32 %s66, 1
        %s321 = sand.u32 %s66, 1
        %s322 = smul.addr %s321, 16
        %s323 = scalar_lea.vmem [#allocation3], %s322
        %p324 = pneg %p79
        %p325 = pneg %p76
        %p326 = pneg %p105
        %p327 = pneg %p102
        %p328 = scmp.lt.s32.totalorder %s20, 1
        %s329 = scalar_select %p328, %s20, 1
        %s330 = smul.addr %s329, 2
        %s331 = smul.addr %s330, 8
        %s332 = scalar_lea.vmem %s2, %s331
        %p333 = pneg %p131
        %p334 = pneg %p128
        %p335 = scmp.lt.s32.totalorder %s20, 1
        %s336 = scalar_select %p335, %s20, 1
        %s337 = smul.addr %s336, 2
        %s338 = smul.addr %s337, 8
        %s339 = scalar_lea.vmem %s3, %s338
        %p340 = pneg %p157
        %p341 = pneg %p154
        %p342 = scmp.lt.s32.totalorder %s20, 1
        %s343 = scalar_select %p342, %s20, 1
        %s344 = smul.addr %s343, 2
        %s345 = smul.addr %s344, 8
        %s346 = scalar_lea.vmem %s4, %s345
        %s347 = sadd.s32 %s20, %s21
        %s348 = smul.u32 2, %s347
        %s349 = sadd.s32 %s20, %s21
        %s350 = smul.u32 2, %s349
        %p351 = scmp.lt.s32.totalorder %s20, 1
        %s352 = scalar_select %p351, %s20, 1
        %s353 = smul.addr %s352, 2
        %s354 = smul.addr %s353, 8
        %s355 = scalar_lea.vmem %s2, %s354
        %p356 = scmp.lt.s32.totalorder %s20, 1
        %s357 = scalar_select %p356, %s20, 1
        %s358 = smul.addr %s357, 2
        %s359 = smul.addr %s358, 8
        %s360 = scalar_lea.vmem %s3, %s359
        %p361 = scmp.lt.s32.totalorder %s20, 1
        %s362 = scalar_select %p361, %s20, 1
        %s363 = smul.addr %s362, 2
        %s364 = smul.addr %s363, 8
        %s365 = scalar_lea.vmem %s4, %s364
        %p366 = scmp.eq.s32.totalorder %s21, 0
        // Predicated region
        $region108: #{dice_loss.1} parent=98 // pred_check
          %p367 = pneg %p366
        $region109: #{dice_loss.1} parent=98 // pred_check_branch
          %369 = sbr.rel (%p367) target = $region111
        $region110: #{dice_loss.1} parent=98 // pred_region
          %370 = vst [vmem:[%s355] sm:$0xff] 0.0
          %371 = vst [vmem:[%s355 + $0x8] sm:$0xff] 0.0
          %372 = vst [vmem:[%s360] sm:$0xff] 0.0
          %373 = vst [vmem:[%s360 + $0x8] sm:$0xff] 0.0
          %374 = vst [vmem:[%s365] sm:$0xff] 0.0
          %375 = vst [vmem:[%s365 + $0x8] sm:$0xff] 0.0
        $region111: #{dice_loss.1} parent=98 // pred_fallthru
          _
        %v376 = vld [vmem:[%s303] sm:$0xff]
        %v377 = vld [vmem:[%s303 + $0x8] sm:$0xff]
        %v378 = vld [vmem:[%s303 + $0x10] sm:$0xff]
        %v379 = vld [vmem:[%s303 + $0x18] sm:$0xff]
        %v380 = vxor.u32 %v376, 2147483648
        %v381 = vxor.u32 %v377, 2147483648
        %v382 = vxor.u32 %v378, 2147483648
        %v383 = vxor.u32 %v379, 2147483648
        %v384 = vmul.f32 %v380, 1.442695
        %v385 = vpow.pop %v384
        %v386 = vmul.f32 %v381, 1.442695
        %v387 = vpow.pop %v386
        %v388 = vmul.f32 %v382, 1.442695
        %v389 = vpow.pop %v388
        %v390 = vmul.f32 %v383, 1.442695
        %v391 = vpow.pop %v390
        %v392 = vadd.f32 %v385, 1.0
        %v393 = vadd.f32 %v387, 1.0
        %v394 = vadd.f32 %v389, 1.0
        %v395 = vadd.f32 %v391, 1.0
        %v396 = vrcp.pop %v392
        %v397 = vmul.f32 1.0, %v396
        %v398 = vrcp.pop %v393
        %v399 = vmul.f32 1.0, %v398
        %v400 = vrcp.pop %v394
        %v401 = vmul.f32 1.0, %v400
        %v402 = vrcp.pop %v395
        %v403 = vmul.f32 1.0, %v402
        %v404 = vld [vmem:[%s310] sm:$0xf]
        %v405 = vld [vmem:[%s310 + $0x4] sm:$0xf]
        %v406 = vld [vmem:[%s310 + $0x8] sm:$0xf]
        %v407 = vld [vmem:[%s310 + $0xc] sm:$0xf]
        %v408 = vunpack.c.l.bf16 %v404
        %v409 = vunpack.c.l.bf16 %v405
        %v410 = vunpack.c.l.bf16 %v406
        %v411 = vunpack.c.l.bf16 %v407
        %v412 = vld [vmem:[%s355] sm:$0xff]
        %v413 = vld [vmem:[%s355 + $0x8] sm:$0xff]
        %v414 = vmul.f32 %v397, %v408
        %v415 = vmul.f32 %v399, %v409
        %v416 = vmul.f32 %v401, %v410
        %v417 = vmul.f32 %v403, %v411
        %v418 = vadd.f32 %v414, %v415
        %v419 = vadd.f32 %v416, %v417
        %v420 = vadd.f32 %v412, %v418
        %v421 = vadd.f32 %v413, %v419
        %422 = vst [vmem:[%s355] sm:$0xff] %v420
        %423 = vst [vmem:[%s355 + $0x8] sm:$0xff] %v421
        %v424 = vld [vmem:[%s360] sm:$0xff]
        %v425 = vld [vmem:[%s360 + $0x8] sm:$0xff]
        %v426 = vadd.f32 %v397, %v399
        %v427 = vadd.f32 %v401, %v403
        %v428 = vadd.f32 %v424, %v426
        %v429 = vadd.f32 %v425, %v427
        %430 = vst [vmem:[%s360] sm:$0xff] %v428
        %431 = vst [vmem:[%s360 + $0x8] sm:$0xff] %v429
        %v432 = vld [vmem:[%s365] sm:$0xff]
        %v433 = vld [vmem:[%s365 + $0x8] sm:$0xff]
        %v434 = vadd.f32 %v408, %v409
        %v435 = vadd.f32 %v410, %v411
        %v436 = vadd.f32 %v432, %v434
        %v437 = vadd.f32 %v433, %v435
        %438 = vst [vmem:[%s365] sm:$0xff] %v436
        %439 = vst [vmem:[%s365 + $0x8] sm:$0xff] %v437
        %p440 = scmp.lt.s32.totalorder %s20, 1
        %s441 = scalar_select %p440, %s20, 1
        %s442 = smul.addr %s441, 2
        %s443 = smul.addr %s442, 8
        %s444 = scalar_lea.vmem %s2, %s443
        %p445 = scmp.lt.s32.totalorder %s20, 1
        %s446 = scalar_select %p445, %s20, 1
        %s447 = smul.addr %s446, 2
        %s448 = smul.addr %s447, 8
        %s449 = scalar_lea.vmem %s3, %s448
        %p450 = scmp.lt.s32.totalorder %s20, 1
        %s451 = scalar_select %p450, %s20, 1
        %s452 = smul.addr %s451, 2
        %s453 = smul.addr %s452, 8
        %s454 = scalar_lea.vmem %s4, %s453
        // Predicated region
        $region112: #{dice_loss.1} parent=98 // pred_check
          %p455 = pneg %p102
        $region113: #{dice_loss.1} parent=98 // pred_check_branch
          %457 = sbr.rel (%p455) target = $region115
        $region114: #{dice_loss.1} parent=98 // pred_region
          _
        $region115: #{dice_loss.1} parent=98 // pred_fallthru
          _
        // Predicated region
        $region116: #{dice_loss.1} parent=98 // pred_check
          %p458 = pneg %p128
        $region117: #{dice_loss.1} parent=98 // pred_check_branch
          %460 = sbr.rel (%p458) target = $region119
        $region118: #{dice_loss.1} parent=98 // pred_region
          _
        $region119: #{dice_loss.1} parent=98 // pred_fallthru
          _
        // Predicated region
        $region120: #{dice_loss.1} parent=98 // pred_check
          %p461 = pneg %p154
        $region121: #{dice_loss.1} parent=98 // pred_check_branch
          %463 = sbr.rel (%p461) target = $region123
        $region122: #{dice_loss.1} parent=98 // pred_region
          _
        $region123: #{dice_loss.1} parent=98 // pred_fallthru
          _
      $region99: #{dice_loss.1} parent=5 // pred_fallthru
        _
      %p464 = scmp.le.s32.totalorder 2, %s11
      // Predicated region
      $region124: #{dice_loss.1} parent=5 // pred_check
        %p465 = pneg %p464
      $region125: #{dice_loss.1} parent=5 // pred_check_branch
        %467 = sbr.rel (%p465) target = $region127
      $region126: #{dice_loss.1} parent=5 // pred_region
        %s468 = ssub.s32 %s11, 2
        // Predicated region
        $region128: #{dice_loss.1} parent=126 // pred_check
          %p469 = pneg %p108
        $region129: #{dice_loss.1} parent=126 // pred_check_branch
          %471 = sbr.rel (%p469) target = $region131
        $region130: #{dice_loss.1} parent=126 // pred_region
          %p472 = scmp.lt.s32.totalorder %s22, 1
          %s473 = scalar_select %p472, %s22, 1
          %s474 = smul.addr %s473, 2
          %s475 = smul.addr %s474, 8
          %s476 = scalar_lea.vmem %s2, %s475
        $region131: #{dice_loss.1} parent=126 // pred_fallthru
          _
        // Predicated region
        $region132: #{dice_loss.1} parent=126 // pred_check
          %p477 = pneg %p134
        $region133: #{dice_loss.1} parent=126 // pred_check_branch
          %479 = sbr.rel (%p477) target = $region135
        $region134: #{dice_loss.1} parent=126 // pred_region
          %p480 = scmp.lt.s32.totalorder %s22, 1
          %s481 = scalar_select %p480, %s22, 1
          %s482 = smul.addr %s481, 2
          %s483 = smul.addr %s482, 8
          %s484 = scalar_lea.vmem %s3, %s483
        $region135: #{dice_loss.1} parent=126 // pred_fallthru
          _
        // Predicated region
        $region136: #{dice_loss.1} parent=126 // pred_check
          %p485 = pneg %p160
        $region137: #{dice_loss.1} parent=126 // pred_check_branch
          %487 = sbr.rel (%p485) target = $region139
        $region138: #{dice_loss.1} parent=126 // pred_region
          %p488 = scmp.lt.s32.totalorder %s22, 1
          %s489 = scalar_select %p488, %s22, 1
          %s490 = smul.addr %s489, 2
          %s491 = smul.addr %s490, 8
          %s492 = scalar_lea.vmem %s4, %s491
        $region139: #{dice_loss.1} parent=126 // pred_fallthru
          _
      $region127: #{dice_loss.1} parent=5 // pred_fallthru
        _
    $region6: #{dice_loss.1} parent=1 // loop_footer
      %s15 = sadd.s32 1, %s11
    $region7: #{dice_loss.1} parent=1 // loop_footer_branch
      %10 = sbr.rel target = $region3
    $region8: #{dice_loss.1} parent=1 // loop_exit
      _

</llo_original>
